<compile_context>
chip_gen: v5e
topology: v5e:2x2
jax: 0.10.0
libtpu: 0.0.40
codegen_flags: <defaults>
</compile_context>

<pallas_src>
import functools

import jax
import jax.numpy as jnp
from jax import lax
from jax.experimental import pallas as pl
from jax.experimental.pallas import tpu as pltpu

NEG_SLOPE = 0.01            # F.leaky_relu default
LANE = 128
SUBLANE_BF16 = 16           # bf16 packs 2 rows / sublane
MAX_ROW_TILE = 512          # per review: 512-sized tiles ~85% of HBM roofline
MAX_EDGE_TILE = 512


def _round_up(x, m):
    return (x + m - 1) // m * m


def _pad2d(a, rows, cols):
    r, c = a.shape
    if r == rows and c == cols:
        return a
    return jnp.pad(a, ((0, rows - r), (0, cols - c)))


@functools.lru_cache(maxsize=1)
def _vmem_capacity_bytes():
    """Generation-aware VMEM capacity (v5e/v6e: 128 MiB, v7x: 64 MiB/TC)."""
    try:
        return int(pltpu.get_tpu_info().vmem_capacity_bytes)
    except Exception:                      # conservative fallback = v7x size
        return 64 * 1024 * 1024


def _vmem_limit_bytes():
    return int(_vmem_capacity_bytes() * 3 // 4)


def _tiling_budget_bytes():
    # Plan tiles against ~half of physical VMEM: leaves headroom for Mosaic
    # internal scratch / semaphores and the approximate byte model below.
    return int(_vmem_capacity_bytes() // 2)


def _spec(shape, index_map, single_buffer=False):
    """BlockSpec helper; single_buffer drops the default double buffer."""
    if single_buffer:
        try:
            return pl.BlockSpec(shape, index_map, pipeline_mode=pl.Buffered(1))
        except TypeError:                  # older jax: keep default buffering
            pass
    return pl.BlockSpec(shape, index_map)


def _layer_vmem_bytes(tile_n, tile_e, e_pad, d_pad, o_pad, out_bytes):
    """Approximate peak VMEM of the two per-layer kernels (max of both)."""
    collapsed = tile_e == e_pad            # full hyperedge axis resident
    # stage 1: H / X / out blocks double-buffered + f32 accumulator.
    s1 = (2 * tile_n * tile_e * 2
          + 2 * tile_n * d_pad * 2
          + 2 * tile_e * d_pad * 2
          + tile_e * d_pad * 4)
    # stage 2: single-buffer whatever is invariant across the reduction axis.
    x_b = (2 if collapsed else 1) * tile_n * d_pad * 2
    sc_b = (2 if collapsed else 1) * tile_n * LANE * 4   # (tile_n,1) lane-pads
    e_b = (1 if collapsed else 2) * tile_e * d_pad * 2
    s2 = (2 * tile_n * tile_e * 2                        # H block
          + e_b + x_b + sc_b
          + 2 * d_pad * o_pad * 2                        # both weight panels
          + 2 * tile_n * o_pad * out_bytes               # output block
          + tile_n * d_pad * 4                           # f32 agg accumulator
          + tile_n * o_pad * 4)                          # f32 self-term scratch
    return max(s1, s2)


def _choose_tiles(n, e, d_pad_max, o_pad_max, out_bytes_max,
                  max_tile_n=None, max_tile_e=None):
    """Pick (tile_n, tile_e) from the per-generation VMEM budget.

    Preference (HBM-bound regime): hold the full hyperedge axis resident
    (X / edge_emb each read from HBM exactly once) with the largest row tile
    that fits; only then fall back to tiling the hyperedge/reduction axis.
    Rows shrink first; the output lane width is never shrunk.
    """
    budget = _tiling_budget_bytes()
    n_align = _round_up(max(n, 1), SUBLANE_BF16)
    e_align = _round_up(max(e, 1), LANE)

    cap_n = min(max_tile_n or MAX_ROW_TILE, n_align)
    cap_n = max(SUBLANE_BF16, cap_n // SUBLANE_BF16 * SUBLANE_BF16)
    cap_e = min(max_tile_e or MAX_EDGE_TILE, e_align)
    cap_e = max(LANE, cap_e // LANE * LANE)

    te_cands = []
    if max_tile_e is None or e_align <= max_tile_e:
        te_cands.append(e_align)                     # collapsed reduction
    for t in (512, 256, 128):
        if t <= cap_e and t < e_align and t not in te_cands:
            te_cands.append(t)
    if not te_cands:
        te_cands = [cap_e]

    def tn_candidates(floor):
        tn = cap_n
        while tn >= floor:
            yield tn
            if tn == floor:
                break
            tn = max(floor, (tn // 2) // SUBLANE_BF16 * SUBLANE_BF16)

    for floor in (min(128, cap_n), SUBLANE_BF16):
        for te in te_cands:
            e_pad = _round_up(e, te)
            for tn in tn_candidates(floor):
                if _layer_vmem_bytes(tn, te, e_pad, d_pad_max, o_pad_max,
                                     out_bytes_max) <= budget:
                    return tn, te
    return SUBLANE_BF16, LANE


# ------------------------- stage 1: edge_emb = H^T @ X -----------------------
def _edge_agg_kernel(h_ref, x_ref, e_ref, acc_ref):
    @pl.when(pl.program_id(1) == 0)
    def _():
        acc_ref[...] = jnp.zeros_like(acc_ref)

    # Contract the node (sublane) axis of both operands: (tn, te)^T . (tn, D)
    # -> (te, D).  The MXU consumes the transposed operand directly; no second
    # copy of H is ever materialized.
    acc_ref[...] += lax.dot_general(
        h_ref[...], x_ref[...],
        dimension_numbers=(((0,), (0,)), ((), ())),
        preferred_element_type=jnp.float32)

    @pl.when(pl.program_id(1) == pl.num_programs(1) - 1)
    def _():
        e_ref[...] = acc_ref[...].astype(e_ref.dtype)


# ---------- stage 2: node aggregation + hstack-matmul + leaky_relu -----------
def _node_update_kernel(h_ref, e_ref, x_ref, scale_ref, w_self_ref, w_agg_ref,
                        o_ref, acc_ref, self_ref):
    k = pl.program_id(1)

    @pl.when(k == 0)
    def _():
        acc_ref[...] = jnp.zeros_like(acc_ref)
        # Hoist the self-term GEMM to the first reduction step so the last
        # step's epilogue is not a serial MXU burst.
        self_ref[...] = jnp.dot(x_ref[...], w_self_ref[...],
                                preferred_element_type=jnp.float32)

    # agg partial sum over hyperedge tiles: (tn, te) @ (te, D) -> (tn, D)
    acc_ref[...] += jnp.dot(h_ref[...], e_ref[...],
                            preferred_element_type=jnp.float32)

    @pl.when(k == pl.num_programs(1) - 1)
    def _():
        # (scale*acc) @ W == scale * (acc @ W): applying the per-node scale
        # after the GEMM shrinks the broadcast-mul to (tile_n, o_pad) and lets
        # acc feed the MXU as bf16 directly.
        agg = jnp.dot(acc_ref[...].astype(w_agg_ref.dtype), w_agg_ref[...],
                      preferred_element_type=jnp.float32)
        z = self_ref[...] + scale_ref[...] * agg
        o_ref[...] = jnp.where(z >= 0, z, NEG_SLOPE * z).astype(o_ref.dtype)


def hypersage_layer(x_bf, h_bf, node_scale, w_self_bf, w_agg_bf,
                    tile_n, tile_e, out_dtype):
    """One HyperSAGE layer on padded operands.

    x_bf:(N_pad,D_pad) bf16   h_bf:(N_pad,E_pad) bf16
    node_scale:(N_pad,1) f32  w_*_bf:(D_pad,O_pad) bf16  -> (N_pad,O_pad)
    """
    n_pad, d_pad = x_bf.shape
    e_pad = h_bf.shape[1]
    o_pad = w_self_bf.shape[1]
    n_tiles = n_pad // tile_n
    e_tiles = e_pad // tile_e
    collapsed = e_tiles == 1           # full hyperedge axis resident in VMEM
    vmem_limit = _vmem_limit_bytes()

    # ---- stage 1: edge_emb = H^T @ X ---------------------------------------
    edge_emb = pl.pallas_call(
        _edge_agg_kernel,
        out_shape=jax.ShapeDtypeStruct((e_pad, d_pad), jnp.bfloat16),
        grid_spec=pltpu.PrefetchScalarGridSpec(
            num_scalar_prefetch=0,
            grid=(e_tiles, n_tiles),
            in_specs=[
                pl.BlockSpec((tile_n, tile_e), lambda ei, ni: (ni, ei)),
                pl.BlockSpec((tile_n, d_pad), lambda ei, ni: (ni, 0)),
            ],
            out_specs=pl.BlockSpec((tile_e, d_pad), lambda ei, ni: (ei, 0)),
            scratch_shapes=[pltpu.VMEM((tile_e, d_pad), jnp.float32)],
        ),
        compiler_params=pltpu.CompilerParams(
            dimension_semantics=("parallel", "arbitrary"),
            vmem_limit_bytes=vmem_limit),
        cost_estimate=pl.CostEstimate(
            flops=2 * n_pad * e_pad * d_pad,
            transcendentals=0,
            bytes_accessed=(2 * n_pad * e_pad                 # H read once
                            + 2 * e_tiles * n_pad * d_pad     # X per e-tile
                            + 2 * e_pad * d_pad)),            # edge_emb write
    )(h_bf, x_bf)

    # ---- stage 2: node update ----------------------------------------------
    in_specs = [
        pl.BlockSpec((tile_n, tile_e), lambda i, k: (i, k)),             # H
        _spec((tile_e, d_pad), lambda i, k: (k, 0),
              single_buffer=collapsed),                                  # edge_emb
        _spec((tile_n, d_pad), lambda i, k: (i, 0),
              single_buffer=not collapsed),                              # X
        _spec((tile_n, 1), lambda i, k: (i, 0),
              single_buffer=not collapsed),                              # scale
        _spec((d_pad, o_pad), lambda i, k: (0, 0), single_buffer=True),  # Wself
        _spec((d_pad, o_pad), lambda i, k: (0, 0), single_buffer=True),  # Wagg
    ]
    out_bytes = jnp.dtype(out_dtype).itemsize
    out = pl.pallas_call(
        _node_update_kernel,
        out_shape=jax.ShapeDtypeStruct((n_pad, o_pad), out_dtype),
        grid_spec=pltpu.PrefetchScalarGridSpec(
            num_scalar_prefetch=0,
            grid=(n_tiles, e_tiles),
            in_specs=in_specs,
            out_specs=pl.BlockSpec((tile_n, o_pad), lambda i, k: (i, 0)),
            scratch_shapes=[pltpu.VMEM((tile_n, d_pad), jnp.float32),
                            pltpu.VMEM((tile_n, o_pad), jnp.float32)],
        ),
        compiler_params=pltpu.CompilerParams(
            dimension_semantics=("parallel", "arbitrary"),
            vmem_limit_bytes=vmem_limit),
        cost_estimate=pl.CostEstimate(
            flops=2 * n_pad * d_pad * (e_pad + 2 * o_pad),
            transcendentals=0,
            bytes_accessed=(2 * n_pad * e_pad                  # H once
                            + 2 * n_tiles * e_pad * d_pad      # edge_emb re-read
                            + 2 * n_pad * d_pad                # X once
                            + 4 * n_pad                        # scale
                            + 2 * 2 * d_pad * o_pad            # weights once
                            + out_bytes * n_pad * o_pad)),     # output write
    )(h_bf, edge_emb, x_bf, node_scale, w_self_bf, w_agg_bf)
    return out


@functools.partial(jax.jit, static_argnames=("max_tile_n", "max_tile_e"))
def hypersage_forward(node_feat, hyper_graph, weights, *,
                      max_tile_n=None, max_tile_e=None):
    """Full multi-layer HyperSAGE forward (full-graph neighbor lists)."""
    h = hyper_graph.astype(jnp.float32)                # (N, E)
    n, d_in = node_feat.shape
    e = h.shape[1]

    # graph_attr (HyperSAGE.initialize).  NOTE: node-by-node is an O(N^2)
    # dense intermediate; precompute / sparsify offline for very large graphs.
    num_edges = h.sum(axis=1)                                        # (N,)
    num_neighbors = (h @ h.T > 0).astype(jnp.float32).sum(axis=1)    # (N,)
    denom = num_edges * num_neighbors
    node_scale = jnp.where(denom > 0, 1.0 / denom, 0.0)              # (N,)

    # ---- tile selection vs. generation-aware VMEM budget --------------------
    dims = [d_in] + [w.shape[1] for w in weights]
    d_pad_max = max(_round_up(d, LANE) for d in dims)
    tile_n, tile_e = _choose_tiles(n, e, d_pad_max, d_pad_max, 4,
                                   max_tile_n, max_tile_e)
    n_pad = _round_up(n, tile_n)
    e_pad = _round_up(e, tile_e)

    h_bf = _pad2d(h, n_pad, e_pad).astype(jnp.bfloat16)      # exact: H is 0/1
    node_scale_pad = _pad2d(node_scale.reshape(-1, 1), n_pad, 1)
    x_bf = _pad2d(node_feat.astype(jnp.float32), n_pad,
                  _round_up(d_in, LANE)).astype(jnp.bfloat16)

    out = None
    out_dim = d_in
    num_layers = len(weights)
    for li, w in enumerate(weights):
        d = w.shape[0] // 2
        out_dim = w.shape[1]
        d_pad = _round_up(d, LANE)
        o_pad = _round_up(out_dim, LANE)
        w_self = _pad2d(w[:d, :].astype(jnp.float32),
                        d_pad, o_pad).astype(jnp.bfloat16)
        w_agg = _pad2d(w[d:, :].astype(jnp.float32),
                       d_pad, o_pad).astype(jnp.bfloat16)
        last = li == num_layers - 1
        # Intermediate-layer activations are emitted as bf16 straight from the
        # kernel (no f32 round-trip through HBM); the last layer stays f32.
        out = hypersage_layer(x_bf, h_bf, node_scale_pad, w_self, w_agg,
                              tile_n, tile_e,
                              jnp.float32 if last else jnp.bfloat16)
        if not last:
            x_bf = out
    return out[:n, :out_dim]


def hypersage_reference(node_feat, hyper_graph, weights):
    """Pure-JAX f32 reference of the same forward (for a tolerance check)."""
    h = hyper_graph.astype(jnp.float32)
    num_edges = h.sum(axis=1)
    num_neighbors = (h @ h.T > 0).astype(jnp.float32).sum(axis=1)
    scale = (1.0 / (num_edges * num_neighbors)).reshape(-1, 1)
    x = node_feat.astype(jnp.float32)
    for w in weights:
        d = w.shape[0] // 2
        agg = scale * (h @ (h.T @ x))
        z = x @ w[:d] + agg @ w[d:]
        x = jnp.where(z >= 0, z, NEG_SLOPE * z)
    return x


def xavier_uniform(key, shape):
    fan_in, fan_out = shape
    bound = (6.0 / (fan_in + fan_out)) ** 0.5
    return jax.random.uniform(key, shape, jnp.float32, -bound, bound)


def make_weights(key, in_dim, hidden_dim, out_dim, num_layers):
    if num_layers > 1:
        keys = jax.random.split(key, num_layers)
        weights = [xavier_uniform(keys[0], (2 * in_dim, hidden_dim))]
        for i in range(num_layers - 2):
            weights.append(xavier_uniform(keys[i + 1],
                                          (2 * hidden_dim, hidden_dim)))
        weights.append(xavier_uniform(keys[-1], (2 * hidden_dim, out_dim)))
        return weights
    return [xavier_uniform(key, (2 * in_dim, out_dim))]


def make_graph(key, n, e, p=0.35):
    # Random binary incidence matrix; guarantee no empty node.
    h = (jax.random.uniform(key, (n, e)) < p).astype(jnp.float32)
    return h.at[jnp.arange(n), jnp.arange(n) % e].set(1.0)


def run_case(key, n, e, in_dim, hidden_dim, out_dim, num_layers,
             max_tile_n=None, max_tile_e=None):
    k_feat, k_h, k_w = jax.random.split(key, 3)
    node_feat = jax.random.normal(k_feat, (n, in_dim), jnp.float32)
    h = make_graph(k_h, n, e)
    weights = make_weights(k_w, in_dim, hidden_dim, out_dim, num_layers)

    out = hypersage_forward(node_feat, h, weights,
                            max_tile_n=max_tile_n, max_tile_e=max_tile_e)
    jax.block_until_ready(out)

    assert out.shape == (n, out_dim), out.shape
    assert out.dtype == jnp.float32

    # Loose correctness check vs f32 reference (kernel matmuls run in bf16).
    ref = hypersage_reference(node_feat, h, weights)
    max_err = float(jnp.max(jnp.abs(out - ref)))
    scale = 1.0 + float(jnp.max(jnp.abs(ref)))
    assert max_err < 5e-2 * scale, (max_err, scale)


if __name__ == "__main__":
    key = jax.random.PRNGKey(0)
    k1, k2 = jax.random.split(key)

    # Small shapes consistent with the module (collapsed-reduction fast path:
    # the full hyperedge axis is VMEM-resident, X / edge_emb read once).
    run_case(k1, n=16, e=8, in_dim=8, hidden_dim=16, out_dim=8, num_layers=2)

    # Larger graph with forced small tile caps: exercises the tiled-reduction
    # path (multiple hyperedge tiles + single-buffered k-invariant blocks).
    run_case(k2, n=200, e=300, in_dim=48, hidden_dim=64, out_dim=32,
             num_layers=2, max_tile_n=64, max_tile_e=128)

    print("KERNEL_OK")
</pallas_src>

<mosaic_0001>
module attributes {stable_mosaic.version = 11 : i64} {
  func.func @_edge_agg_kernel(%arg0: i32, %arg1: i32, %arg2: memref<16x128xbf16, #tpu.memory_space<vmem>>, %arg3: memref<16x128xbf16, #tpu.memory_space<vmem>>, %arg4: memref<128x128xbf16, #tpu.memory_space<vmem>>, %arg5: memref<128x128xf32, #tpu.memory_space<vmem>>) attributes {dimension_semantics = [#tpu.dimension_semantics<parallel>, #tpu.dimension_semantics<arbitrary>], iteration_bounds = array<i64: 1, 1>, scalar_prefetch = 0 : i64, scratch_operands = 1 : i64, tpu.core_type = #tpu.core_type<tc>, window_params = [{transform_indices = @transform_0, window_bounds = array<i64: 16, 128>}, {transform_indices = @transform_1, window_bounds = array<i64: 16, 128>}, {transform_indices = @transform_2, window_bounds = array<i64: 128, 128>}]} {
    %c0_i32 = arith.constant 0 : i32
    %0 = arith.cmpi eq, %arg1, %c0_i32 : i32
    %1 = arith.extui %0 : i1 to i32
    %c0_i32_0 = arith.constant 0 : i32
    %2 = arith.cmpi ne, %1, %c0_i32_0 : i32
    scf.if %2 {
      %cst_10 = arith.constant 0.000000e+00 : f32
      %12 = vector.broadcast %cst_10 : f32 to vector<128x128xf32>
      %c0_11 = arith.constant 0 : index
      %c0_12 = arith.constant 0 : index
      %13 = vector.load %arg5[%c0_11, %c0_12] : memref<128x128xf32, #tpu.memory_space<vmem>>, vector<128x128xf32>
      tpu.vector_store %arg5[%c0_11, %c0_12], %12 {strides = array<i32>} : memref<128x128xf32, #tpu.memory_space<vmem>>, vector<128x128xf32>,
    } else {
    }
    %c0 = arith.constant 0 : index
    %c0_1 = arith.constant 0 : index
    %3 = vector.load %arg5[%c0, %c0_1] : memref<128x128xf32, #tpu.memory_space<vmem>>, vector<128x128xf32>
    %c0_2 = arith.constant 0 : index
    %c0_3 = arith.constant 0 : index
    %4 = vector.load %arg2[%c0_2, %c0_3] : memref<16x128xbf16, #tpu.memory_space<vmem>>, vector<16x128xbf16>
    %c0_4 = arith.constant 0 : index
    %c0_5 = arith.constant 0 : index
    %5 = vector.load %arg3[%c0_4, %c0_5] : memref<16x128xbf16, #tpu.memory_space<vmem>>, vector<16x128xbf16>
    %cst = arith.constant dense<0.000000e+00> : vector<128x128xf32>
    %6 = tpu.matmul %4, %5, %cst {dimension_numbers = #tpu.dot_dimension_numbers<[0], [0], [1], [1], [0, 1, 1, 1], [], []>} : vector<16x128xbf16>, vector<16x128xbf16>, vector<128x128xf32> -> vector<128x128xf32>
    %7 = arith.addf %3, %6 : vector<128x128xf32>
    %c0_6 = arith.constant 0 : index
    %c0_7 = arith.constant 0 : index
    %8 = vector.load %arg5[%c0_6, %c0_7] : memref<128x128xf32, #tpu.memory_space<vmem>>, vector<128x128xf32>
    tpu.vector_store %arg5[%c0_6, %c0_7], %7 {strides = array<i32>} : memref<128x128xf32, #tpu.memory_space<vmem>>, vector<128x128xf32>,
    %c0_i32_8 = arith.constant 0 : i32
    %9 = arith.cmpi eq, %arg1, %c0_i32_8 : i32
    %10 = arith.extui %9 : i1 to i32
    %c0_i32_9 = arith.constant 0 : i32
    %11 = arith.cmpi ne, %10, %c0_i32_9 : i32
    scf.if %11 {
      %c0_10 = arith.constant 0 : index
      %c0_11 = arith.constant 0 : index
      %12 = vector.load %arg5[%c0_10, %c0_11] : memref<128x128xf32, #tpu.memory_space<vmem>>, vector<128x128xf32>
      %13 = arith.truncf %12 : vector<128x128xf32> to vector<128x128xbf16>
      %c0_12 = arith.constant 0 : index
      %c0_13 = arith.constant 0 : index
      %14 = vector.load %arg4[%c0_12, %c0_13] : memref<128x128xbf16, #tpu.memory_space<vmem>>, vector<128x128xbf16>
      tpu.vector_store %arg4[%c0_12, %c0_13], %13 {strides = array<i32>} : memref<128x128xbf16, #tpu.memory_space<vmem>>, vector<128x128xbf16>,
    } else {
    }
    return
  }
  func.func @transform_0(%arg0: i32, %arg1: i32) -> (i32, i32) {
    %c0_i32 = arith.constant 0 : i32
    return %arg1, %arg0 : i32, i32
  }
  func.func @transform_1(%arg0: i32, %arg1: i32) -> (i32, i32) {
    %c0_i32 = arith.constant 0 : i32
    %c0_i32_0 = arith.constant 0 : i32
    return %arg1, %c0_i32 : i32, i32
  }
  func.func @transform_2(%arg0: i32, %arg1: i32) -> (i32, i32) {
    %c0_i32 = arith.constant 0 : i32
    %c0_i32_0 = arith.constant 0 : i32
    return %arg0, %c0_i32 : i32, i32
  }
}

module attributes {stable_mosaic.version = 11 : i64} {
  func.func @_node_update_kernel(%arg0: i32, %arg1: i32, %arg2: memref<16x128xbf16, #tpu.memory_space<vmem>>, %arg3: memref<128x128xbf16, #tpu.memory_space<vmem>>, %arg4: memref<16x128xbf16, #tpu.memory_space<vmem>>, %arg5: memref<16x1xf32, #tpu.memory_space<vmem>>, %arg6: memref<128x128xbf16, #tpu.memory_space<vmem>>, %arg7: memref<128x128xbf16, #tpu.memory_space<vmem>>, %arg8: memref<16x128xbf16, #tpu.memory_space<vmem>>, %arg9: memref<16x128xf32, #tpu.memory_space<vmem>>, %arg10: memref<16x128xf32, #tpu.memory_space<vmem>>) attributes {dimension_semantics = [#tpu.dimension_semantics<parallel>, #tpu.dimension_semantics<arbitrary>], iteration_bounds = array<i64: 1, 1>, scalar_prefetch = 0 : i64, scratch_operands = 2 : i64, tpu.core_type = #tpu.core_type<tc>, window_params = [{transform_indices = @transform_0, window_bounds = array<i64: 16, 128>}, {pipeline_mode = #tpu.pipeline_mode<synchronous>, transform_indices = @transform_1, window_bounds = array<i64: 128, 128>}, {transform_indices = @transform_2, window_bounds = array<i64: 16, 128>}, {transform_indices = @transform_3, window_bounds = array<i64: 16, 1>}, {pipeline_mode = #tpu.pipeline_mode<synchronous>, transform_indices = @transform_4, window_bounds = array<i64: 128, 128>}, {pipeline_mode = #tpu.pipeline_mode<synchronous>, transform_indices = @transform_5, window_bounds = array<i64: 128, 128>}, {transform_indices = @transform_6, window_bounds = array<i64: 16, 128>}]} {
    %c0_i32 = arith.constant 0 : i32
    %0 = arith.cmpi eq, %arg1, %c0_i32 : i32
    %1 = arith.extui %0 : i1 to i32
    %c0_i32_0 = arith.constant 0 : i32
    %2 = arith.cmpi ne, %1, %c0_i32_0 : i32
    scf.if %2 {
      %cst_10 = arith.constant 0.000000e+00 : f32
      %12 = vector.broadcast %cst_10 : f32 to vector<16x128xf32>
      %c0_11 = arith.constant 0 : index
      %c0_12 = arith.constant 0 : index
      %13 = vector.load %arg9[%c0_11, %c0_12] : memref<16x128xf32, #tpu.memory_space<vmem>>, vector<16x128xf32>
      tpu.vector_store %arg9[%c0_11, %c0_12], %12 {strides = array<i32>} : memref<16x128xf32, #tpu.memory_space<vmem>>, vector<16x128xf32>,
      %c0_13 = arith.constant 0 : index
      %c0_14 = arith.constant 0 : index
      %14 = vector.load %arg4[%c0_13, %c0_14] : memref<16x128xbf16, #tpu.memory_space<vmem>>, vector<16x128xbf16>
      %c0_15 = arith.constant 0 : index
      %c0_16 = arith.constant 0 : index
      %15 = vector.load %arg6[%c0_15, %c0_16] : memref<128x128xbf16, #tpu.memory_space<vmem>>, vector<128x128xbf16>
      %cst_17 = arith.constant dense<0.000000e+00> : vector<16x128xf32>
      %16 = tpu.matmul %14, %15, %cst_17 {dimension_numbers = #tpu.dot_dimension_numbers<[1], [0], [0], [1], [0, 0, 1, 1], [], []>} : vector<16x128xbf16>, vector<128x128xbf16>, vector<16x128xf32> -> vector<16x128xf32>
      %c0_18 = arith.constant 0 : index
      %c0_19 = arith.constant 0 : index
      %17 = vector.load %arg10[%c0_18, %c0_19] : memref<16x128xf32, #tpu.memory_space<vmem>>, vector<16x128xf32>
      tpu.vector_store %arg10[%c0_18, %c0_19], %16 {strides = array<i32>} : memref<16x128xf32, #tpu.memory_space<vmem>>, vector<16x128xf32>,
    } else {
    }
    %c0 = arith.constant 0 : index
    %c0_1 = arith.constant 0 : index
    %3 = vector.load %arg9[%c0, %c0_1] : memref<16x128xf32, #tpu.memory_space<vmem>>, vector<16x128xf32>
    %c0_2 = arith.constant 0 : index
    %c0_3 = arith.constant 0 : index
    %4 = vector.load %arg2[%c0_2, %c0_3] : memref<16x128xbf16, #tpu.memory_space<vmem>>, vector<16x128xbf16>
    %c0_4 = arith.constant 0 : index
    %c0_5 = arith.constant 0 : index
    %5 = vector.load %arg3[%c0_4, %c0_5] : memref<128x128xbf16, #tpu.memory_space<vmem>>, vector<128x128xbf16>
    %cst = arith.constant dense<0.000000e+00> : vector<16x128xf32>
    %6 = tpu.matmul %4, %5, %cst {dimension_numbers = #tpu.dot_dimension_numbers<[1], [0], [0], [1], [0, 0, 1, 1], [], []>} : vector<16x128xbf16>, vector<128x128xbf16>, vector<16x128xf32> -> vector<16x128xf32>
    %7 = arith.addf %3, %6 : vector<16x128xf32>
    %c0_6 = arith.constant 0 : index
    %c0_7 = arith.constant 0 : index
    %8 = vector.load %arg9[%c0_6, %c0_7] : memref<16x128xf32, #tpu.memory_space<vmem>>, vector<16x128xf32>
    tpu.vector_store %arg9[%c0_6, %c0_7], %7 {strides = array<i32>} : memref<16x128xf32, #tpu.memory_space<vmem>>, vector<16x128xf32>,
    %c0_i32_8 = arith.constant 0 : i32
    %9 = arith.cmpi eq, %arg1, %c0_i32_8 : i32
    %10 = arith.extui %9 : i1 to i32
    %c0_i32_9 = arith.constant 0 : i32
    %11 = arith.cmpi ne, %10, %c0_i32_9 : i32
    scf.if %11 {
      %c0_10 = arith.constant 0 : index
      %c0_11 = arith.constant 0 : index
      %12 = vector.load %arg9[%c0_10, %c0_11] : memref<16x128xf32, #tpu.memory_space<vmem>>, vector<16x128xf32>
      %13 = arith.truncf %12 : vector<16x128xf32> to vector<16x128xbf16>
      %c0_12 = arith.constant 0 : index
      %c0_13 = arith.constant 0 : index
      %14 = vector.load %arg7[%c0_12, %c0_13] : memref<128x128xbf16, #tpu.memory_space<vmem>>, vector<128x128xbf16>
      %cst_14 = arith.constant dense<0.000000e+00> : vector<16x128xf32>
      %15 = tpu.matmul %13, %14, %cst_14 {dimension_numbers = #tpu.dot_dimension_numbers<[1], [0], [0], [1], [0, 0, 1, 1], [], []>} : vector<16x128xbf16>, vector<128x128xbf16>, vector<16x128xf32> -> vector<16x128xf32>
      %c0_15 = arith.constant 0 : index
      %c0_16 = arith.constant 0 : index
      %16 = vector.load %arg10[%c0_15, %c0_16] : memref<16x128xf32, #tpu.memory_space<vmem>>, vector<16x128xf32>
      %c0_17 = arith.constant 0 : index
      %c0_18 = arith.constant 0 : index
      %17 = vector.load %arg5[%c0_17, %c0_18] : memref<16x1xf32, #tpu.memory_space<vmem>>, vector<16x1xf32>
      %18 = vector.broadcast %17 : vector<16x1xf32> to vector<16x128xf32>
      %19 = arith.mulf %18, %15 : vector<16x128xf32>
      %20 = arith.addf %16, %19 : vector<16x128xf32>
      %cst_19 = arith.constant 0.000000e+00 : f32
      %21 = vector.broadcast %cst_19 : f32 to vector<16x128xf32>
      %22 = arith.cmpf oge, %20, %21 : vector<16x128xf32>
      %cst_20 = arith.constant 0.00999999977 : f32
      %23 = vector.broadcast %cst_20 : f32 to vector<16x128xf32>
      %24 = arith.mulf %23, %20 : vector<16x128xf32>
      %25 = arith.select %22, %20, %24 : vector<16x128xi1>, vector<16x128xf32>
      %26 = arith.truncf %25 : vector<16x128xf32> to vector<16x128xbf16>
      %c0_21 = arith.constant 0 : index
      %c0_22 = arith.constant 0 : index
      %27 = vector.load %arg8[%c0_21, %c0_22] : memref<16x128xbf16, #tpu.memory_space<vmem>>, vector<16x128xbf16>
      tpu.vector_store %arg8[%c0_21, %c0_22], %26 {strides = array<i32>} : memref<16x128xbf16, #tpu.memory_space<vmem>>, vector<16x128xbf16>,
    } else {
    }
    return
  }
  func.func @transform_0(%arg0: i32, %arg1: i32) -> (i32, i32) {
    %c0_i32 = arith.constant 0 : i32
    return %arg0, %arg1 : i32, i32
  }
  func.func @transform_1(%arg0: i32, %arg1: i32) -> (i32, i32) {
    %c0_i32 = arith.constant 0 : i32
    %c0_i32_0 = arith.constant 0 : i32
    return %arg1, %c0_i32 : i32, i32
  }
  func.func @transform_2(%arg0: i32, %arg1: i32) -> (i32, i32) {
    %c0_i32 = arith.constant 0 : i32
    %c0_i32_0 = arith.constant 0 : i32
    return %arg0, %c0_i32 : i32, i32
  }
  func.func @transform_3(%arg0: i32, %arg1: i32) -> (i32, i32) {
    %c0_i32 = arith.constant 0 : i32
    %c0_i32_0 = arith.constant 0 : i32
    return %arg0, %c0_i32 : i32, i32
  }
  func.func @transform_4(%arg0: i32, %arg1: i32) -> (i32, i32) {
    %c0_i32 = arith.constant 0 : i32
    %c0_i32_0 = arith.constant 0 : i32
    %c0_i32_1 = arith.constant 0 : i32
    return %c0_i32, %c0_i32_0 : i32, i32
  }
  func.func @transform_5(%arg0: i32, %arg1: i32) -> (i32, i32) {
    %c0_i32 = arith.constant 0 : i32
    %c0_i32_0 = arith.constant 0 : i32
    %c0_i32_1 = arith.constant 0 : i32
    return %c0_i32, %c0_i32_0 : i32, i32
  }
  func.func @transform_6(%arg0: i32, %arg1: i32) -> (i32, i32) {
    %c0_i32 = arith.constant 0 : i32
    %c0_i32_0 = arith.constant 0 : i32
    return %arg0, %c0_i32 : i32, i32
  }
}

module attributes {stable_mosaic.version = 11 : i64} {
  func.func @_node_update_kernel(%arg0: i32, %arg1: i32, %arg2: memref<16x128xbf16, #tpu.memory_space<vmem>>, %arg3: memref<128x128xbf16, #tpu.memory_space<vmem>>, %arg4: memref<16x128xbf16, #tpu.memory_space<vmem>>, %arg5: memref<16x1xf32, #tpu.memory_space<vmem>>, %arg6: memref<128x128xbf16, #tpu.memory_space<vmem>>, %arg7: memref<128x128xbf16, #tpu.memory_space<vmem>>, %arg8: memref<16x128xf32, #tpu.memory_space<vmem>>, %arg9: memref<16x128xf32, #tpu.memory_space<vmem>>, %arg10: memref<16x128xf32, #tpu.memory_space<vmem>>) attributes {dimension_semantics = [#tpu.dimension_semantics<parallel>, #tpu.dimension_semantics<arbitrary>], iteration_bounds = array<i64: 1, 1>, scalar_prefetch = 0 : i64, scratch_operands = 2 : i64, tpu.core_type = #tpu.core_type<tc>, window_params = [{transform_indices = @transform_0, window_bounds = array<i64: 16, 128>}, {pipeline_mode = #tpu.pipeline_mode<synchronous>, transform_indices = @transform_1, window_bounds = array<i64: 128, 128>}, {transform_indices = @transform_2, window_bounds = array<i64: 16, 128>}, {transform_indices = @transform_3, window_bounds = array<i64: 16, 1>}, {pipeline_mode = #tpu.pipeline_mode<synchronous>, transform_indices = @transform_4, window_bounds = array<i64: 128, 128>}, {pipeline_mode = #tpu.pipeline_mode<synchronous>, transform_indices = @transform_5, window_bounds = array<i64: 128, 128>}, {transform_indices = @transform_6, window_bounds = array<i64: 16, 128>}]} {
    %c0_i32 = arith.constant 0 : i32
    %0 = arith.cmpi eq, %arg1, %c0_i32 : i32
    %1 = arith.extui %0 : i1 to i32
    %c0_i32_0 = arith.constant 0 : i32
    %2 = arith.cmpi ne, %1, %c0_i32_0 : i32
    scf.if %2 {
      %cst_10 = arith.constant 0.000000e+00 : f32
      %12 = vector.broadcast %cst_10 : f32 to vector<16x128xf32>
      %c0_11 = arith.constant 0 : index
      %c0_12 = arith.constant 0 : index
      %13 = vector.load %arg9[%c0_11, %c0_12] : memref<16x128xf32, #tpu.memory_space<vmem>>, vector<16x128xf32>
      tpu.vector_store %arg9[%c0_11, %c0_12], %12 {strides = array<i32>} : memref<16x128xf32, #tpu.memory_space<vmem>>, vector<16x128xf32>,
      %c0_13 = arith.constant 0 : index
      %c0_14 = arith.constant 0 : index
      %14 = vector.load %arg4[%c0_13, %c0_14] : memref<16x128xbf16, #tpu.memory_space<vmem>>, vector<16x128xbf16>
      %c0_15 = arith.constant 0 : index
      %c0_16 = arith.constant 0 : index
      %15 = vector.load %arg6[%c0_15, %c0_16] : memref<128x128xbf16, #tpu.memory_space<vmem>>, vector<128x128xbf16>
      %cst_17 = arith.constant dense<0.000000e+00> : vector<16x128xf32>
      %16 = tpu.matmul %14, %15, %cst_17 {dimension_numbers = #tpu.dot_dimension_numbers<[1], [0], [0], [1], [0, 0, 1, 1], [], []>} : vector<16x128xbf16>, vector<128x128xbf16>, vector<16x128xf32> -> vector<16x128xf32>
      %c0_18 = arith.constant 0 : index
      %c0_19 = arith.constant 0 : index
      %17 = vector.load %arg10[%c0_18, %c0_19] : memref<16x128xf32, #tpu.memory_space<vmem>>, vector<16x128xf32>
      tpu.vector_store %arg10[%c0_18, %c0_19], %16 {strides = array<i32>} : memref<16x128xf32, #tpu.memory_space<vmem>>, vector<16x128xf32>,
    } else {
    }
    %c0 = arith.constant 0 : index
    %c0_1 = arith.constant 0 : index
    %3 = vector.load %arg9[%c0, %c0_1] : memref<16x128xf32, #tpu.memory_space<vmem>>, vector<16x128xf32>
    %c0_2 = arith.constant 0 : index
    %c0_3 = arith.constant 0 : index
    %4 = vector.load %arg2[%c0_2, %c0_3] : memref<16x128xbf16, #tpu.memory_space<vmem>>, vector<16x128xbf16>
    %c0_4 = arith.constant 0 : index
    %c0_5 = arith.constant 0 : index
    %5 = vector.load %arg3[%c0_4, %c0_5] : memref<128x128xbf16, #tpu.memory_space<vmem>>, vector<128x128xbf16>
    %cst = arith.constant dense<0.000000e+00> : vector<16x128xf32>
    %6 = tpu.matmul %4, %5, %cst {dimension_numbers = #tpu.dot_dimension_numbers<[1], [0], [0], [1], [0, 0, 1, 1], [], []>} : vector<16x128xbf16>, vector<128x128xbf16>, vector<16x128xf32> -> vector<16x128xf32>
    %7 = arith.addf %3, %6 : vector<16x128xf32>
    %c0_6 = arith.constant 0 : index
    %c0_7 = arith.constant 0 : index
    %8 = vector.load %arg9[%c0_6, %c0_7] : memref<16x128xf32, #tpu.memory_space<vmem>>, vector<16x128xf32>
    tpu.vector_store %arg9[%c0_6, %c0_7], %7 {strides = array<i32>} : memref<16x128xf32, #tpu.memory_space<vmem>>, vector<16x128xf32>,
    %c0_i32_8 = arith.constant 0 : i32
    %9 = arith.cmpi eq, %arg1, %c0_i32_8 : i32
    %10 = arith.extui %9 : i1 to i32
    %c0_i32_9 = arith.constant 0 : i32
    %11 = arith.cmpi ne, %10, %c0_i32_9 : i32
    scf.if %11 {
      %c0_10 = arith.constant 0 : index
      %c0_11 = arith.constant 0 : index
      %12 = vector.load %arg9[%c0_10, %c0_11] : memref<16x128xf32, #tpu.memory_space<vmem>>, vector<16x128xf32>
      %13 = arith.truncf %12 : vector<16x128xf32> to vector<16x128xbf16>
      %c0_12 = arith.constant 0 : index
      %c0_13 = arith.constant 0 : index
      %14 = vector.load %arg7[%c0_12, %c0_13] : memref<128x128xbf16, #tpu.memory_space<vmem>>, vector<128x128xbf16>
      %cst_14 = arith.constant dense<0.000000e+00> : vector<16x128xf32>
      %15 = tpu.matmul %13, %14, %cst_14 {dimension_numbers = #tpu.dot_dimension_numbers<[1], [0], [0], [1], [0, 0, 1, 1], [], []>} : vector<16x128xbf16>, vector<128x128xbf16>, vector<16x128xf32> -> vector<16x128xf32>
      %c0_15 = arith.constant 0 : index
      %c0_16 = arith.constant 0 : index
      %16 = vector.load %arg10[%c0_15, %c0_16] : memref<16x128xf32, #tpu.memory_space<vmem>>, vector<16x128xf32>
      %c0_17 = arith.constant 0 : index
      %c0_18 = arith.constant 0 : index
      %17 = vector.load %arg5[%c0_17, %c0_18] : memref<16x1xf32, #tpu.memory_space<vmem>>, vector<16x1xf32>
      %18 = vector.broadcast %17 : vector<16x1xf32> to vector<16x128xf32>
      %19 = arith.mulf %18, %15 : vector<16x128xf32>
      %20 = arith.addf %16, %19 : vector<16x128xf32>
      %cst_19 = arith.constant 0.000000e+00 : f32
      %21 = vector.broadcast %cst_19 : f32 to vector<16x128xf32>
      %22 = arith.cmpf oge, %20, %21 : vector<16x128xf32>
      %cst_20 = arith.constant 0.00999999977 : f32
      %23 = vector.broadcast %cst_20 : f32 to vector<16x128xf32>
      %24 = arith.mulf %23, %20 : vector<16x128xf32>
      %25 = arith.select %22, %20, %24 : vector<16x128xi1>, vector<16x128xf32>
      %c0_21 = arith.constant 0 : index
      %c0_22 = arith.constant 0 : index
      %26 = vector.load %arg8[%c0_21, %c0_22] : memref<16x128xf32, #tpu.memory_space<vmem>>, vector<16x128xf32>
      tpu.vector_store %arg8[%c0_21, %c0_22], %25 {strides = array<i32>} : memref<16x128xf32, #tpu.memory_space<vmem>>, vector<16x128xf32>,
    } else {
    }
    return
  }
  func.func @transform_0(%arg0: i32, %arg1: i32) -> (i32, i32) {
    %c0_i32 = arith.constant 0 : i32
    return %arg0, %arg1 : i32, i32
  }
  func.func @transform_1(%arg0: i32, %arg1: i32) -> (i32, i32) {
    %c0_i32 = arith.constant 0 : i32
    %c0_i32_0 = arith.constant 0 : i32
    return %arg1, %c0_i32 : i32, i32
  }
  func.func @transform_2(%arg0: i32, %arg1: i32) -> (i32, i32) {
    %c0_i32 = arith.constant 0 : i32
    %c0_i32_0 = arith.constant 0 : i32
    return %arg0, %c0_i32 : i32, i32
  }
  func.func @transform_3(%arg0: i32, %arg1: i32) -> (i32, i32) {
    %c0_i32 = arith.constant 0 : i32
    %c0_i32_0 = arith.constant 0 : i32
    return %arg0, %c0_i32 : i32, i32
  }
  func.func @transform_4(%arg0: i32, %arg1: i32) -> (i32, i32) {
    %c0_i32 = arith.constant 0 : i32
    %c0_i32_0 = arith.constant 0 : i32
    %c0_i32_1 = arith.constant 0 : i32
    return %c0_i32, %c0_i32_0 : i32, i32
  }
  func.func @transform_5(%arg0: i32, %arg1: i32) -> (i32, i32) {
    %c0_i32 = arith.constant 0 : i32
    %c0_i32_0 = arith.constant 0 : i32
    %c0_i32_1 = arith.constant 0 : i32
    return %c0_i32, %c0_i32_0 : i32, i32
  }
  func.func @transform_6(%arg0: i32, %arg1: i32) -> (i32, i32) {
    %c0_i32 = arith.constant 0 : i32
    %c0_i32_0 = arith.constant 0 : i32
    return %arg0, %c0_i32 : i32, i32
  }
}

</mosaic_0001>

<llo_original>
// kernel: hypersage_forward.4
$region0: #{hypersage_forward.4}
  #allocation0 [shape = 'u32[]', space=smem, size = 0x4, offset = 0x4, fixed_abs, tag = 'smem constant byte address 0x4 - core index']
  #allocation1 [shape = 'u32[72,128]{1,0:T(1,128)}', space=vmem, size = 0x9000, scoped, tag = 'internal scratch']
  #allocation2 [shape = 'f32[128,128]{1,0:T(8,128)}', space=vmem, size = 0x10000, scoped, tag = 'scratch operand']
  %s0 = inlined_call_operand.vmem [shape: bf16[16,128], index: 0, kind: input, shape index: {}]
  %s1 = inlined_call_operand.vmem [shape: bf16[16,128], index: 1, kind: input, shape index: {}]
  %s2 = inlined_call_operand.vmem [shape: bf16[128,128], index: 2, kind: output, shape index: {}]
  %s3 = sld [smem:[#allocation0]]
  $region26: #{hypersage_forward.4} parent=0
    _
  %s5 = ssub.s32 1, %s3
  %s6 = scalar_select 0, %s5, %s3
  // Predicated region
  $region2: #{hypersage_forward.4} parent=0 // pred_check
    _
  $region3: #{hypersage_forward.4} parent=0 // pred_check_branch
    %8 = sbr.rel (0) target = $region5
  $region4: #{hypersage_forward.4} parent=0 // pred_region
    _
  $region5: #{hypersage_forward.4} parent=0 // pred_fallthru
    _
  // Predicated region
  $region6: #{hypersage_forward.4} parent=0 // pred_check
    _
  $region7: #{hypersage_forward.4} parent=0 // pred_check_branch
    %10 = sbr.rel (0) target = $region9
  $region8: #{hypersage_forward.4} parent=0 // pred_region
    _
  $region9: #{hypersage_forward.4} parent=0 // pred_fallthru
    _
  %p12 = scmp.eq.s32.totalorder 0, 0
  // Predicated region
  $region10: #{hypersage_forward.4} parent=0 // pred_check
    %p13 = pneg %p12
  $region11: #{hypersage_forward.4} parent=0 // pred_check_branch
    %15 = sbr.rel (%p13) target = $region13
  $region12: #{hypersage_forward.4} parent=0 // pred_region
    %16 = vst [vmem:[#allocation2] sm:$0xff] 0.0
    %17 = vst [vmem:[#allocation2 + $0x8] sm:$0xff] 0.0
    %18 = vst [vmem:[#allocation2 + $0x10] sm:$0xff] 0.0
    %19 = vst [vmem:[#allocation2 + $0x18] sm:$0xff] 0.0
    %20 = vst [vmem:[#allocation2 + $0x20] sm:$0xff] 0.0
    %21 = vst [vmem:[#allocation2 + $0x28] sm:$0xff] 0.0
    %22 = vst [vmem:[#allocation2 + $0x30] sm:$0xff] 0.0
    %23 = vst [vmem:[#allocation2 + $0x38] sm:$0xff] 0.0
    %24 = vst [vmem:[#allocation2 + $0x40] sm:$0xff] 0.0
    %25 = vst [vmem:[#allocation2 + $0x48] sm:$0xff] 0.0
    %26 = vst [vmem:[#allocation2 + $0x50] sm:$0xff] 0.0
    %27 = vst [vmem:[#allocation2 + $0x58] sm:$0xff] 0.0
    %28 = vst [vmem:[#allocation2 + $0x60] sm:$0xff] 0.0
    %29 = vst [vmem:[#allocation2 + $0x68] sm:$0xff] 0.0
    %30 = vst [vmem:[#allocation2 + $0x70] sm:$0xff] 0.0
    %31 = vst [vmem:[#allocation2 + $0x78] sm:$0xff] 0.0
  $region13: #{hypersage_forward.4} parent=0 // pred_fallthru
    _
  %v32 = vld [vmem:[#allocation2] sm:$0xff]
  %v33 = vld [vmem:[#allocation2 + $0x8] sm:$0xff]
  %v34 = vld [vmem:[#allocation2 + $0x10] sm:$0xff]
  %v35 = vld [vmem:[#allocation2 + $0x18] sm:$0xff]
  %v36 = vld [vmem:[#allocation2 + $0x20] sm:$0xff]
  %v37 = vld [vmem:[#allocation2 + $0x28] sm:$0xff]
  %v38 = vld [vmem:[#allocation2 + $0x30] sm:$0xff]
  %v39 = vld [vmem:[#allocation2 + $0x38] sm:$0xff]
  %v40 = vld [vmem:[#allocation2 + $0x40] sm:$0xff]
  %v41 = vld [vmem:[#allocation2 + $0x48] sm:$0xff]
  %v42 = vld [vmem:[#allocation2 + $0x50] sm:$0xff]
  %v43 = vld [vmem:[#allocation2 + $0x58] sm:$0xff]
  %v44 = vld [vmem:[#allocation2 + $0x60] sm:$0xff]
  %v45 = vld [vmem:[#allocation2 + $0x68] sm:$0xff]
  %v46 = vld [vmem:[#allocation2 + $0x70] sm:$0xff]
  %v47 = vld [vmem:[#allocation2 + $0x78] sm:$0xff]
  %v48 = vld [vmem:[%s0] sm:$0xf]
  %v49 = vld [vmem:[%s0 + $0x4] sm:$0xf]
  %v50 = vld [vmem:[%s1] sm:$0xf]
  %v51 = vld [vmem:[%s1 + $0x4] sm:$0xf]
  %v54 = vunpack.c.l.b16 %v48
  %v55 = vunpack.c.l.b16 %v49
  %v56 = vpack.c.b16 %v55, %v54
  %58 = vxpose.xlu0.c.b16.start [1/8] %v56, 128
  %59 = vxpose.xlu0.c.b16.cont [2/8] 0, 128
  %60 = vxpose.xlu0.c.b16.cont [3/8] 0, 128
  %61 = vxpose.xlu0.c.b16.cont [4/8] 0, 128
  %62 = vxpose.xlu0.c.b16.cont [5/8] 0, 128
  %63 = vxpose.xlu0.c.b16.cont [6/8] 0, 128
  %64 = vxpose.xlu0.c.b16.cont [7/8] 0, 128
  %65 = vxpose.xlu0.c.b16.end [8/8] 0, 128
  %v66 = vpop.trf.xlu0
  %v67 = vpop.trf.xlu0
  %v68 = vpop.trf.xlu0
  %v69 = vpop.trf.xlu0
  %v70 = vpop.trf.xlu0
  %v71 = vpop.trf.xlu0
  %v72 = vpop.trf.xlu0
  %v73 = vpop.trf.xlu0
  %v76 = vunpack.c.l.b16 %v50
  %v77 = vunpack.c.l.b16 %v51
  %v78 = vpack.c.b16 %v77, %v76
  %vm80 = vcmask 130048
  %v82 = vsel %vm80, %v66, 0
  %v85 = vsel %vm80, %v67, 0
  %v88 = vsel %vm80, %v68, 0
  %v91 = vsel %vm80, %v69, 0
  %v94 = vsel %vm80, %v70, 0
  %v97 = vsel %vm80, %v71, 0
  %v100 = vsel %vm80, %v72, 0
  %v103 = vsel %vm80, %v73, 0
  %105 = vmatpush.bf16.msra.mxu0 0
  %106 = vmatpush.bf16.msra.mxu0 0
  %107 = vmatpush.bf16.msra.mxu0 0
  %108 = vmatpush.bf16.msra.mxu0 0
  %109 = vmatpush.bf16.msra.mxu0 0
  %110 = vmatpush.bf16.msra.mxu0 0
  %111 = vmatpush.bf16.msra.mxu0 0
  %112 = vmatpush.bf16.msra.mxu0 %v78
  %113 = vmatmul.bf16.gmra.mxu0 %v82
  %v114 = vpop.f32.mrf.mxu0
  %v115 = vadd.f32 0.0, %v114
  %v116 = vpop.f32.mrf.mxu0
  %v117 = vadd.f32 0.0, %v116
  %118 = vmatmul.bf16.gmra.mxu0 %v85
  %v119 = vpop.f32.mrf.mxu0
  %v120 = vadd.f32 0.0, %v119
  %v121 = vpop.f32.mrf.mxu0
  %v122 = vadd.f32 0.0, %v121
  %123 = vmatmul.bf16.gmra.mxu0 %v88
  %v124 = vpop.f32.mrf.mxu0
  %v125 = vadd.f32 0.0, %v124
  %v126 = vpop.f32.mrf.mxu0
  %v127 = vadd.f32 0.0, %v126
  %128 = vmatmul.bf16.gmra.mxu0 %v91
  %v129 = vpop.f32.mrf.mxu0
  %v130 = vadd.f32 0.0, %v129
  %v131 = vpop.f32.mrf.mxu0
  %v132 = vadd.f32 0.0, %v131
  %133 = vmatmul.bf16.gmra.mxu0 %v94
  %v134 = vpop.f32.mrf.mxu0
  %v135 = vadd.f32 0.0, %v134
  %v136 = vpop.f32.mrf.mxu0
  %v137 = vadd.f32 0.0, %v136
  %138 = vmatmul.bf16.gmra.mxu0 %v97
  %v139 = vpop.f32.mrf.mxu0
  %v140 = vadd.f32 0.0, %v139
  %v141 = vpop.f32.mrf.mxu0
  %v142 = vadd.f32 0.0, %v141
  %143 = vmatmul.bf16.gmra.mxu0 %v100
  %v144 = vpop.f32.mrf.mxu0
  %v145 = vadd.f32 0.0, %v144
  %v146 = vpop.f32.mrf.mxu0
  %v147 = vadd.f32 0.0, %v146
  %148 = vmatmul.bf16.gmra.mxu0 %v103
  %v149 = vpop.f32.mrf.mxu0
  %v150 = vadd.f32 0.0, %v149
  %v151 = vpop.f32.mrf.mxu0
  %v152 = vadd.f32 0.0, %v151
  %153 = vdwg.mxu0
  %v154 = vadd.f32 %v32, %v115
  %v155 = vadd.f32 %v33, %v117
  %v156 = vadd.f32 %v34, %v120
  %v157 = vadd.f32 %v35, %v122
  %v158 = vadd.f32 %v36, %v125
  %v159 = vadd.f32 %v37, %v127
  %v160 = vadd.f32 %v38, %v130
  %v161 = vadd.f32 %v39, %v132
  %v162 = vadd.f32 %v40, %v135
  %v163 = vadd.f32 %v41, %v137
  %v164 = vadd.f32 %v42, %v140
  %v165 = vadd.f32 %v43, %v142
  %v166 = vadd.f32 %v44, %v145
  %v167 = vadd.f32 %v45, %v147
  %v168 = vadd.f32 %v46, %v150
  %v169 = vadd.f32 %v47, %v152
  %170 = vst [vmem:[#allocation2] sm:$0xff] %v154
  %171 = vst [vmem:[#allocation2 + $0x8] sm:$0xff] %v155
  %172 = vst [vmem:[#allocation2 + $0x10] sm:$0xff] %v156
  %173 = vst [vmem:[#allocation2 + $0x18] sm:$0xff] %v157
  %174 = vst [vmem:[#allocation2 + $0x20] sm:$0xff] %v158
  %175 = vst [vmem:[#allocation2 + $0x28] sm:$0xff] %v159
  %176 = vst [vmem:[#allocation2 + $0x30] sm:$0xff] %v160
  %177 = vst [vmem:[#allocation2 + $0x38] sm:$0xff] %v161
  %178 = vst [vmem:[#allocation2 + $0x40] sm:$0xff] %v162
  %179 = vst [vmem:[#allocation2 + $0x48] sm:$0xff] %v163
  %180 = vst [vmem:[#allocation2 + $0x50] sm:$0xff] %v164
  %181 = vst [vmem:[#allocation2 + $0x58] sm:$0xff] %v165
  %182 = vst [vmem:[#allocation2 + $0x60] sm:$0xff] %v166
  %183 = vst [vmem:[#allocation2 + $0x68] sm:$0xff] %v167
  %184 = vst [vmem:[#allocation2 + $0x70] sm:$0xff] %v168
  %185 = vst [vmem:[#allocation2 + $0x78] sm:$0xff] %v169
  // Predicated region
  $region14: #{hypersage_forward.4} parent=0 // pred_check
    %p186 = pneg %p12
  $region15: #{hypersage_forward.4} parent=0 // pred_check_branch
    %188 = sbr.rel (%p186) target = $region17
  $region16: #{hypersage_forward.4} parent=0 // pred_region
    %v189 = vld [vmem:[#allocation2] sm:$0xff]
    %v190 = vld [vmem:[#allocation2 + $0x8] sm:$0xff]
    %v191 = vld [vmem:[#allocation2 + $0x10] sm:$0xff]
    %v192 = vld [vmem:[#allocation2 + $0x18] sm:$0xff]
    %v193 = vld [vmem:[#allocation2 + $0x20] sm:$0xff]
    %v194 = vld [vmem:[#allocation2 + $0x28] sm:$0xff]
    %v195 = vld [vmem:[#allocation2 + $0x30] sm:$0xff]
    %v196 = vld [vmem:[#allocation2 + $0x38] sm:$0xff]
    %v197 = vld [vmem:[#allocation2 + $0x40] sm:$0xff]
    %v198 = vld [vmem:[#allocation2 + $0x48] sm:$0xff]
    %v199 = vld [vmem:[#allocation2 + $0x50] sm:$0xff]
    %v200 = vld [vmem:[#allocation2 + $0x58] sm:$0xff]
    %v201 = vld [vmem:[#allocation2 + $0x60] sm:$0xff]
    %v202 = vld [vmem:[#allocation2 + $0x68] sm:$0xff]
    %v203 = vld [vmem:[#allocation2 + $0x70] sm:$0xff]
    %v204 = vld [vmem:[#allocation2 + $0x78] sm:$0xff]
    %v205 = vpack.c.bf16 %v189, %v189
    %v206 = vpack.c.bf16 %v190, %v190
    %v207 = vpack.c.bf16 %v191, %v191
    %v208 = vpack.c.bf16 %v192, %v192
    %v209 = vpack.c.bf16 %v193, %v193
    %v210 = vpack.c.bf16 %v194, %v194
    %v211 = vpack.c.bf16 %v195, %v195
    %v212 = vpack.c.bf16 %v196, %v196
    %v213 = vpack.c.bf16 %v197, %v197
    %v214 = vpack.c.bf16 %v198, %v198
    %v215 = vpack.c.bf16 %v199, %v199
    %v216 = vpack.c.bf16 %v200, %v200
    %v217 = vpack.c.bf16 %v201, %v201
    %v218 = vpack.c.bf16 %v202, %v202
    %v219 = vpack.c.bf16 %v203, %v203
    %v220 = vpack.c.bf16 %v204, %v204
    %221 = vst [vmem:[%s2] sm:$0xf] %v205
    %222 = vst [vmem:[%s2 + $0x4] sm:$0xf] %v206
    %223 = vst [vmem:[%s2 + $0x8] sm:$0xf] %v207
    %224 = vst [vmem:[%s2 + $0xc] sm:$0xf] %v208
    %225 = vst [vmem:[%s2 + $0x10] sm:$0xf] %v209
    %226 = vst [vmem:[%s2 + $0x14] sm:$0xf] %v210
    %227 = vst [vmem:[%s2 + $0x18] sm:$0xf] %v211
    %228 = vst [vmem:[%s2 + $0x1c] sm:$0xf] %v212
    %229 = vst [vmem:[%s2 + $0x20] sm:$0xf] %v213
    %230 = vst [vmem:[%s2 + $0x24] sm:$0xf] %v214
    %231 = vst [vmem:[%s2 + $0x28] sm:$0xf] %v215
    %232 = vst [vmem:[%s2 + $0x2c] sm:$0xf] %v216
    %233 = vst [vmem:[%s2 + $0x30] sm:$0xf] %v217
    %234 = vst [vmem:[%s2 + $0x34] sm:$0xf] %v218
    %235 = vst [vmem:[%s2 + $0x38] sm:$0xf] %v219
    %236 = vst [vmem:[%s2 + $0x3c] sm:$0xf] %v220
  $region17: #{hypersage_forward.4} parent=0 // pred_fallthru
    _
  // Predicated region
  $region18: #{hypersage_forward.4} parent=0 // pred_check
    _
  $region19: #{hypersage_forward.4} parent=0 // pred_check_branch
    %238 = sbr.rel (0) target = $region21
  $region20: #{hypersage_forward.4} parent=0 // pred_region
    _
  $region21: #{hypersage_forward.4} parent=0 // pred_fallthru
    _
  // Predicated region
  $region22: #{hypersage_forward.4} parent=0 // pred_check
    _
  $region23: #{hypersage_forward.4} parent=0 // pred_check_branch
    %240 = sbr.rel (0) target = $region25
  $region24: #{hypersage_forward.4} parent=0 // pred_region
    _
  $region25: #{hypersage_forward.4} parent=0 // pred_fallthru
    _

// kernel: hypersage_forward.5
$region0: #{hypersage_forward.5}
  #allocation0 [shape = 'u32[]', space=smem, size = 0x4, offset = 0x4, fixed_abs, tag = 'smem constant byte address 0x4 - core index']
  #allocation1 [shape = 'u32[72,128]{1,0:T(1,128)}', space=vmem, size = 0x9000, scoped, tag = 'internal scratch']
  #allocation2 [shape = 'f32[16,128]{1,0:T(8,128)}', space=vmem, size = 0x2000, scoped, tag = 'scratch operand']
  #allocation3 [shape = 'f32[16,128]{1,0:T(8,128)}', space=vmem, size = 0x2000, scoped, tag = 'scratch operand']
  %s0 = inlined_call_operand.vmem [shape: bf16[16,128], index: 0, kind: input, shape index: {}]
  %s1 = inlined_call_operand.vmem [shape: bf16[128,128], index: 1, kind: input, shape index: {}]
  %s2 = inlined_call_operand.vmem [shape: bf16[16,128], index: 2, kind: input, shape index: {}]
  %s3 = inlined_call_operand.vmem [shape: f32[16,1], index: 3, kind: input, shape index: {}]
  %s4 = inlined_call_operand.vmem [shape: bf16[128,128], index: 4, kind: input, shape index: {}]
  %s5 = inlined_call_operand.vmem [shape: bf16[128,128], index: 5, kind: input, shape index: {}]
  %s6 = inlined_call_operand.vmem [shape: bf16[16,128], index: 6, kind: output, shape index: {}]
  %s7 = sld [smem:[#allocation0]]
  $region42: #{hypersage_forward.5} parent=0
    _
  %s9 = ssub.s32 1, %s7
  %s10 = scalar_select 0, %s9, %s7
  // Predicated region
  $region2: #{hypersage_forward.5} parent=0 // pred_check
    _
  $region3: #{hypersage_forward.5} parent=0 // pred_check_branch
    %12 = sbr.rel (0) target = $region5
  $region4: #{hypersage_forward.5} parent=0 // pred_region
    _
  $region5: #{hypersage_forward.5} parent=0 // pred_fallthru
    _
  // Predicated region
  $region6: #{hypersage_forward.5} parent=0 // pred_check
    _
  $region7: #{hypersage_forward.5} parent=0 // pred_check_branch
    %14 = sbr.rel (0) target = $region9
  $region8: #{hypersage_forward.5} parent=0 // pred_region
    _
  $region9: #{hypersage_forward.5} parent=0 // pred_fallthru
    _
  // Predicated region
  $region10: #{hypersage_forward.5} parent=0 // pred_check
    _
  $region11: #{hypersage_forward.5} parent=0 // pred_check_branch
    %16 = sbr.rel (0) target = $region13
  $region12: #{hypersage_forward.5} parent=0 // pred_region
    _
  $region13: #{hypersage_forward.5} parent=0 // pred_fallthru
    _
  // Predicated region
  $region14: #{hypersage_forward.5} parent=0 // pred_check
    _
  $region15: #{hypersage_forward.5} parent=0 // pred_check_branch
    %18 = sbr.rel (0) target = $region17
  $region16: #{hypersage_forward.5} parent=0 // pred_region
    _
  $region17: #{hypersage_forward.5} parent=0 // pred_fallthru
    _
  // Predicated region
  $region18: #{hypersage_forward.5} parent=0 // pred_check
    _
  $region19: #{hypersage_forward.5} parent=0 // pred_check_branch
    %20 = sbr.rel (0) target = $region21
  $region20: #{hypersage_forward.5} parent=0 // pred_region
    _
  $region21: #{hypersage_forward.5} parent=0 // pred_fallthru
    _
  // Predicated region
  $region22: #{hypersage_forward.5} parent=0 // pred_check
    _
  $region23: #{hypersage_forward.5} parent=0 // pred_check_branch
    %22 = sbr.rel (0) target = $region25
  $region24: #{hypersage_forward.5} parent=0 // pred_region
    _
  $region25: #{hypersage_forward.5} parent=0 // pred_fallthru
    _
  %p23 = scmp.eq.s32.totalorder 0, 0
  // Predicated region
  $region26: #{hypersage_forward.5} parent=0 // pred_check
    %p24 = pneg %p23
  $region27: #{hypersage_forward.5} parent=0 // pred_check_branch
    %26 = sbr.rel (%p24) target = $region29
  $region28: #{hypersage_forward.5} parent=0 // pred_region
    %27 = vst [vmem:[#allocation2] sm:$0xff] 0.0
    %28 = vst [vmem:[#allocation2 + $0x8] sm:$0xff] 0.0
    %v29 = vld [vmem:[%s2] sm:$0xf]
    %v30 = vld [vmem:[%s2 + $0x4] sm:$0xf]
    %v31 = vld [vmem:[%s4] sm:$0xf]
    %v32 = vld [vmem:[%s4 + $0x4] sm:$0xf]
    %v33 = vld [vmem:[%s4 + $0x8] sm:$0xf]
    %v34 = vld [vmem:[%s4 + $0xc] sm:$0xf]
    %v35 = vld [vmem:[%s4 + $0x10] sm:$0xf]
    %v36 = vld [vmem:[%s4 + $0x14] sm:$0xf]
    %v37 = vld [vmem:[%s4 + $0x18] sm:$0xf]
    %v38 = vld [vmem:[%s4 + $0x1c] sm:$0xf]
    %v39 = vld [vmem:[%s4 + $0x20] sm:$0xf]
    %v40 = vld [vmem:[%s4 + $0x24] sm:$0xf]
    %v41 = vld [vmem:[%s4 + $0x28] sm:$0xf]
    %v42 = vld [vmem:[%s4 + $0x2c] sm:$0xf]
    %v43 = vld [vmem:[%s4 + $0x30] sm:$0xf]
    %v44 = vld [vmem:[%s4 + $0x34] sm:$0xf]
    %v45 = vld [vmem:[%s4 + $0x38] sm:$0xf]
    %v46 = vld [vmem:[%s4 + $0x3c] sm:$0xf]
    %v49 = vunpack.c.l.b16 %v29
    %v50 = vunpack.c.l.b16 %v30
    %v51 = vpack.c.b16 %v50, %v49
    %v69 = vunpack.c.l.b16 %v31
    %v70 = vunpack.c.l.b16 %v32
    %v71 = vunpack.c.l.b16 %v33
    %v72 = vunpack.c.l.b16 %v34
    %v73 = vunpack.c.l.b16 %v35
    %v74 = vunpack.c.l.b16 %v36
    %v75 = vunpack.c.l.b16 %v37
    %v76 = vunpack.c.l.b16 %v38
    %v77 = vunpack.c.l.b16 %v39
    %v78 = vunpack.c.l.b16 %v40
    %v79 = vunpack.c.l.b16 %v41
    %v80 = vunpack.c.l.b16 %v42
    %v81 = vunpack.c.l.b16 %v43
    %v82 = vunpack.c.l.b16 %v44
    %v83 = vunpack.c.l.b16 %v45
    %v84 = vunpack.c.l.b16 %v46
    %v85 = vpack.c.b16 %v70, %v69
    %v86 = vpack.c.b16 %v72, %v71
    %v87 = vpack.c.b16 %v74, %v73
    %v88 = vpack.c.b16 %v76, %v75
    %v89 = vpack.c.b16 %v78, %v77
    %v90 = vpack.c.b16 %v80, %v79
    %v91 = vpack.c.b16 %v82, %v81
    %v92 = vpack.c.b16 %v84, %v83
    %101 = vmatpush.bf16.msra.mxu0 %v92
    %102 = vmatpush.bf16.msra.mxu0 %v91
    %103 = vmatpush.bf16.msra.mxu0 %v90
    %104 = vmatpush.bf16.msra.mxu0 %v89
    %105 = vmatpush.bf16.msra.mxu0 %v88
    %106 = vmatpush.bf16.msra.mxu0 %v87
    %107 = vmatpush.bf16.msra.mxu0 %v86
    %108 = vmatpush.bf16.msra.mxu0 %v85
    %109 = vmatmul.bf16.gmra.mxu0 %v51
    %v110 = vpop.f32.mrf.mxu0
    %v111 = vadd.f32 0.0, %v110
    %v112 = vpop.f32.mrf.mxu0
    %v113 = vadd.f32 0.0, %v112
    %114 = vdwg.mxu0
    %115 = vst [vmem:[#allocation3] sm:$0xff] %v111
    %116 = vst [vmem:[#allocation3 + $0x8] sm:$0xff] %v113
  $region29: #{hypersage_forward.5} parent=0 // pred_fallthru
    _
  %v117 = vld [vmem:[#allocation2] sm:$0xff]
  %v118 = vld [vmem:[#allocation2 + $0x8] sm:$0xff]
  %v119 = vld [vmem:[%s0] sm:$0xf]
  %v120 = vld [vmem:[%s0 + $0x4] sm:$0xf]
  %v121 = vld [vmem:[%s1] sm:$0xf]
  %v122 = vld [vmem:[%s1 + $0x4] sm:$0xf]
  %v123 = vld [vmem:[%s1 + $0x8] sm:$0xf]
  %v124 = vld [vmem:[%s1 + $0xc] sm:$0xf]
  %v125 = vld [vmem:[%s1 + $0x10] sm:$0xf]
  %v126 = vld [vmem:[%s1 + $0x14] sm:$0xf]
  %v127 = vld [vmem:[%s1 + $0x18] sm:$0xf]
  %v128 = vld [vmem:[%s1 + $0x1c] sm:$0xf]
  %v129 = vld [vmem:[%s1 + $0x20] sm:$0xf]
  %v130 = vld [vmem:[%s1 + $0x24] sm:$0xf]
  %v131 = vld [vmem:[%s1 + $0x28] sm:$0xf]
  %v132 = vld [vmem:[%s1 + $0x2c] sm:$0xf]
  %v133 = vld [vmem:[%s1 + $0x30] sm:$0xf]
  %v134 = vld [vmem:[%s1 + $0x34] sm:$0xf]
  %v135 = vld [vmem:[%s1 + $0x38] sm:$0xf]
  %v136 = vld [vmem:[%s1 + $0x3c] sm:$0xf]
  %v139 = vunpack.c.l.b16 %v119
  %v140 = vunpack.c.l.b16 %v120
  %v141 = vpack.c.b16 %v140, %v139
  %v159 = vunpack.c.l.b16 %v121
  %v160 = vunpack.c.l.b16 %v122
  %v161 = vunpack.c.l.b16 %v123
  %v162 = vunpack.c.l.b16 %v124
  %v163 = vunpack.c.l.b16 %v125
  %v164 = vunpack.c.l.b16 %v126
  %v165 = vunpack.c.l.b16 %v127
  %v166 = vunpack.c.l.b16 %v128
  %v167 = vunpack.c.l.b16 %v129
  %v168 = vunpack.c.l.b16 %v130
  %v169 = vunpack.c.l.b16 %v131
  %v170 = vunpack.c.l.b16 %v132
  %v171 = vunpack.c.l.b16 %v133
  %v172 = vunpack.c.l.b16 %v134
  %v173 = vunpack.c.l.b16 %v135
  %v174 = vunpack.c.l.b16 %v136
  %v175 = vpack.c.b16 %v160, %v159
  %v176 = vpack.c.b16 %v162, %v161
  %v177 = vpack.c.b16 %v164, %v163
  %v178 = vpack.c.b16 %v166, %v165
  %v179 = vpack.c.b16 %v168, %v167
  %v180 = vpack.c.b16 %v170, %v169
  %v181 = vpack.c.b16 %v172, %v171
  %v182 = vpack.c.b16 %v174, %v173
  %191 = vmatpush.bf16.msra.mxu0 %v182
  %192 = vmatpush.bf16.msra.mxu0 %v181
  %193 = vmatpush.bf16.msra.mxu0 %v180
  %194 = vmatpush.bf16.msra.mxu0 %v179
  %195 = vmatpush.bf16.msra.mxu0 %v178
  %196 = vmatpush.bf16.msra.mxu0 %v177
  %197 = vmatpush.bf16.msra.mxu0 %v176
  %198 = vmatpush.bf16.msra.mxu0 %v175
  %199 = vmatmul.bf16.gmra.mxu0 %v141
  %v200 = vpop.f32.mrf.mxu0
  %v201 = vadd.f32 0.0, %v200
  %v202 = vpop.f32.mrf.mxu0
  %v203 = vadd.f32 0.0, %v202
  %204 = vdwg.mxu0
  %v205 = vadd.f32 %v117, %v201
  %v206 = vadd.f32 %v118, %v203
  %207 = vst [vmem:[#allocation2] sm:$0xff] %v205
  %208 = vst [vmem:[#allocation2 + $0x8] sm:$0xff] %v206
  // Predicated region
  $region30: #{hypersage_forward.5} parent=0 // pred_check
    %p209 = pneg %p23
  $region31: #{hypersage_forward.5} parent=0 // pred_check_branch
    %211 = sbr.rel (%p209) target = $region33
  $region32: #{hypersage_forward.5} parent=0 // pred_region
    %v212 = vld [vmem:[#allocation2] sm:$0xff]
    %v213 = vld [vmem:[#allocation2 + $0x8] sm:$0xff]
    %v214 = vpack.c.bf16 %v213, %v212
    %v215 = vld [vmem:[%s5] sm:$0xf]
    %v216 = vld [vmem:[%s5 + $0x4] sm:$0xf]
    %v217 = vld [vmem:[%s5 + $0x8] sm:$0xf]
    %v218 = vld [vmem:[%s5 + $0xc] sm:$0xf]
    %v219 = vld [vmem:[%s5 + $0x10] sm:$0xf]
    %v220 = vld [vmem:[%s5 + $0x14] sm:$0xf]
    %v221 = vld [vmem:[%s5 + $0x18] sm:$0xf]
    %v222 = vld [vmem:[%s5 + $0x1c] sm:$0xf]
    %v223 = vld [vmem:[%s5 + $0x20] sm:$0xf]
    %v224 = vld [vmem:[%s5 + $0x24] sm:$0xf]
    %v225 = vld [vmem:[%s5 + $0x28] sm:$0xf]
    %v226 = vld [vmem:[%s5 + $0x2c] sm:$0xf]
    %v227 = vld [vmem:[%s5 + $0x30] sm:$0xf]
    %v228 = vld [vmem:[%s5 + $0x34] sm:$0xf]
    %v229 = vld [vmem:[%s5 + $0x38] sm:$0xf]
    %v230 = vld [vmem:[%s5 + $0x3c] sm:$0xf]
    %v247 = vunpack.c.l.b16 %v215
    %v248 = vunpack.c.l.b16 %v216
    %v249 = vunpack.c.l.b16 %v217
    %v250 = vunpack.c.l.b16 %v218
    %v251 = vunpack.c.l.b16 %v219
    %v252 = vunpack.c.l.b16 %v220
    %v253 = vunpack.c.l.b16 %v221
    %v254 = vunpack.c.l.b16 %v222
    %v255 = vunpack.c.l.b16 %v223
    %v256 = vunpack.c.l.b16 %v224
    %v257 = vunpack.c.l.b16 %v225
    %v258 = vunpack.c.l.b16 %v226
    %v259 = vunpack.c.l.b16 %v227
    %v260 = vunpack.c.l.b16 %v228
    %v261 = vunpack.c.l.b16 %v229
    %v262 = vunpack.c.l.b16 %v230
    %v263 = vpack.c.b16 %v248, %v247
    %v264 = vpack.c.b16 %v250, %v249
    %v265 = vpack.c.b16 %v252, %v251
    %v266 = vpack.c.b16 %v254, %v253
    %v267 = vpack.c.b16 %v256, %v255
    %v268 = vpack.c.b16 %v258, %v257
    %v269 = vpack.c.b16 %v260, %v259
    %v270 = vpack.c.b16 %v262, %v261
    %279 = vmatpush.bf16.msra.mxu0 %v270
    %280 = vmatpush.bf16.msra.mxu0 %v269
    %281 = vmatpush.bf16.msra.mxu0 %v268
    %282 = vmatpush.bf16.msra.mxu0 %v267
    %283 = vmatpush.bf16.msra.mxu0 %v266
    %284 = vmatpush.bf16.msra.mxu0 %v265
    %285 = vmatpush.bf16.msra.mxu0 %v264
    %286 = vmatpush.bf16.msra.mxu0 %v263
    %287 = vmatmul.bf16.gmra.mxu0 %v214
    %v288 = vpop.f32.mrf.mxu0
    %v289 = vadd.f32 0.0, %v288
    %v290 = vpop.f32.mrf.mxu0
    %v291 = vadd.f32 0.0, %v290
    %292 = vdwg.mxu0
    %v293 = vld [vmem:[#allocation3] sm:$0xff]
    %v294 = vld [vmem:[#allocation3 + $0x8] sm:$0xff]
    %v295 = vld [vmem:[%s3] sm:$0xff]
    %v296 = vld [vmem:[%s3 + $0x8] sm:$0xff]
    %298 = vset.pattern.permute.xlu0 0
    %299 = vperm.xlu0 %298, %v295
    %v300 = vpop.permute.xlu0 %299
    %303 = vset.pattern.permute.xlu0 0
    %304 = vperm.xlu0 %303, %v296
    %v305 = vpop.permute.xlu0 %304
    %v307 = vmul.f32 %v300, %v289
    %v308 = vmul.f32 %v305, %v291
    %v309 = vadd.f32 %v293, %v307
    %v310 = vadd.f32 %v294, %v308
    %vm311 = vcmp.ge.f32.partialorder %v309, 0.0
    %vm312 = vcmp.ge.f32.partialorder %v310, 0.0
    %v313 = vmul.f32 %v309, 0.01
    %v314 = vmul.f32 %v310, 0.01
    %v315 = vsel %vm311, %v309, %v313
    %v316 = vsel %vm312, %v310, %v314
    %v317 = vpack.c.bf16 %v315, %v315
    %v318 = vpack.c.bf16 %v316, %v316
    %319 = vst [vmem:[%s6] sm:$0xf] %v317
    %320 = vst [vmem:[%s6 + $0x4] sm:$0xf] %v318
  $region33: #{hypersage_forward.5} parent=0 // pred_fallthru
    _
  // Predicated region
  $region34: #{hypersage_forward.5} parent=0 // pred_check
    _
  $region35: #{hypersage_forward.5} parent=0 // pred_check_branch
    %322 = sbr.rel (0) target = $region37
  $region36: #{hypersage_forward.5} parent=0 // pred_region
    _
  $region37: #{hypersage_forward.5} parent=0 // pred_fallthru
    _
  // Predicated region
  $region38: #{hypersage_forward.5} parent=0 // pred_check
    _
  $region39: #{hypersage_forward.5} parent=0 // pred_check_branch
    %324 = sbr.rel (0) target = $region41
  $region40: #{hypersage_forward.5} parent=0 // pred_region
    _
  $region41: #{hypersage_forward.5} parent=0 // pred_fallthru
    _

// kernel: hypersage_forward.7
$region0: #{hypersage_forward.7}
  #allocation0 [shape = 'u32[]', space=smem, size = 0x4, offset = 0x4, fixed_abs, tag = 'smem constant byte address 0x4 - core index']
  #allocation1 [shape = 'u32[72,128]{1,0:T(1,128)}', space=vmem, size = 0x9000, scoped, tag = 'internal scratch']
  #allocation2 [shape = 'f32[16,128]{1,0:T(8,128)}', space=vmem, size = 0x2000, scoped, tag = 'scratch operand']
  #allocation3 [shape = 'f32[16,128]{1,0:T(8,128)}', space=vmem, size = 0x2000, scoped, tag = 'scratch operand']
  %s0 = inlined_call_operand.vmem [shape: bf16[16,128], index: 0, kind: input, shape index: {}]
  %s1 = inlined_call_operand.vmem [shape: bf16[128,128], index: 1, kind: input, shape index: {}]
  %s2 = inlined_call_operand.vmem [shape: bf16[16,128], index: 2, kind: input, shape index: {}]
  %s3 = inlined_call_operand.vmem [shape: f32[16,1], index: 3, kind: input, shape index: {}]
  %s4 = inlined_call_operand.vmem [shape: bf16[128,128], index: 4, kind: input, shape index: {}]
  %s5 = inlined_call_operand.vmem [shape: bf16[128,128], index: 5, kind: input, shape index: {}]
  %s6 = inlined_call_operand.vmem [shape: f32[16,128], index: 6, kind: output, shape index: {}]
  %s7 = sld [smem:[#allocation0]]
  $region42: #{hypersage_forward.7} parent=0
    _
  %s9 = ssub.s32 1, %s7
  %s10 = scalar_select 0, %s9, %s7
  // Predicated region
  $region2: #{hypersage_forward.7} parent=0 // pred_check
    _
  $region3: #{hypersage_forward.7} parent=0 // pred_check_branch
    %12 = sbr.rel (0) target = $region5
  $region4: #{hypersage_forward.7} parent=0 // pred_region
    _
  $region5: #{hypersage_forward.7} parent=0 // pred_fallthru
    _
  // Predicated region
  $region6: #{hypersage_forward.7} parent=0 // pred_check
    _
  $region7: #{hypersage_forward.7} parent=0 // pred_check_branch
    %14 = sbr.rel (0) target = $region9
  $region8: #{hypersage_forward.7} parent=0 // pred_region
    _
  $region9: #{hypersage_forward.7} parent=0 // pred_fallthru
    _
  // Predicated region
  $region10: #{hypersage_forward.7} parent=0 // pred_check
    _
  $region11: #{hypersage_forward.7} parent=0 // pred_check_branch
    %16 = sbr.rel (0) target = $region13
  $region12: #{hypersage_forward.7} parent=0 // pred_region
    _
  $region13: #{hypersage_forward.7} parent=0 // pred_fallthru
    _
  // Predicated region
  $region14: #{hypersage_forward.7} parent=0 // pred_check
    _
  $region15: #{hypersage_forward.7} parent=0 // pred_check_branch
    %18 = sbr.rel (0) target = $region17
  $region16: #{hypersage_forward.7} parent=0 // pred_region
    _
  $region17: #{hypersage_forward.7} parent=0 // pred_fallthru
    _
  // Predicated region
  $region18: #{hypersage_forward.7} parent=0 // pred_check
    _
  $region19: #{hypersage_forward.7} parent=0 // pred_check_branch
    %20 = sbr.rel (0) target = $region21
  $region20: #{hypersage_forward.7} parent=0 // pred_region
    _
  $region21: #{hypersage_forward.7} parent=0 // pred_fallthru
    _
  // Predicated region
  $region22: #{hypersage_forward.7} parent=0 // pred_check
    _
  $region23: #{hypersage_forward.7} parent=0 // pred_check_branch
    %22 = sbr.rel (0) target = $region25
  $region24: #{hypersage_forward.7} parent=0 // pred_region
    _
  $region25: #{hypersage_forward.7} parent=0 // pred_fallthru
    _
  %p23 = scmp.eq.s32.totalorder 0, 0
  // Predicated region
  $region26: #{hypersage_forward.7} parent=0 // pred_check
    %p24 = pneg %p23
  $region27: #{hypersage_forward.7} parent=0 // pred_check_branch
    %26 = sbr.rel (%p24) target = $region29
  $region28: #{hypersage_forward.7} parent=0 // pred_region
    %27 = vst [vmem:[#allocation2] sm:$0xff] 0.0
    %28 = vst [vmem:[#allocation2 + $0x8] sm:$0xff] 0.0
    %v29 = vld [vmem:[%s2] sm:$0xf]
    %v30 = vld [vmem:[%s2 + $0x4] sm:$0xf]
    %v31 = vld [vmem:[%s4] sm:$0xf]
    %v32 = vld [vmem:[%s4 + $0x4] sm:$0xf]
    %v33 = vld [vmem:[%s4 + $0x8] sm:$0xf]
    %v34 = vld [vmem:[%s4 + $0xc] sm:$0xf]
    %v35 = vld [vmem:[%s4 + $0x10] sm:$0xf]
    %v36 = vld [vmem:[%s4 + $0x14] sm:$0xf]
    %v37 = vld [vmem:[%s4 + $0x18] sm:$0xf]
    %v38 = vld [vmem:[%s4 + $0x1c] sm:$0xf]
    %v39 = vld [vmem:[%s4 + $0x20] sm:$0xf]
    %v40 = vld [vmem:[%s4 + $0x24] sm:$0xf]
    %v41 = vld [vmem:[%s4 + $0x28] sm:$0xf]
    %v42 = vld [vmem:[%s4 + $0x2c] sm:$0xf]
    %v43 = vld [vmem:[%s4 + $0x30] sm:$0xf]
    %v44 = vld [vmem:[%s4 + $0x34] sm:$0xf]
    %v45 = vld [vmem:[%s4 + $0x38] sm:$0xf]
    %v46 = vld [vmem:[%s4 + $0x3c] sm:$0xf]
    %v49 = vunpack.c.l.b16 %v29
    %v50 = vunpack.c.l.b16 %v30
    %v51 = vpack.c.b16 %v50, %v49
    %v69 = vunpack.c.l.b16 %v31
    %v70 = vunpack.c.l.b16 %v32
    %v71 = vunpack.c.l.b16 %v33
    %v72 = vunpack.c.l.b16 %v34
    %v73 = vunpack.c.l.b16 %v35
    %v74 = vunpack.c.l.b16 %v36
    %v75 = vunpack.c.l.b16 %v37
    %v76 = vunpack.c.l.b16 %v38
    %v77 = vunpack.c.l.b16 %v39
    %v78 = vunpack.c.l.b16 %v40
    %v79 = vunpack.c.l.b16 %v41
    %v80 = vunpack.c.l.b16 %v42
    %v81 = vunpack.c.l.b16 %v43
    %v82 = vunpack.c.l.b16 %v44
    %v83 = vunpack.c.l.b16 %v45
    %v84 = vunpack.c.l.b16 %v46
    %v85 = vpack.c.b16 %v70, %v69
    %v86 = vpack.c.b16 %v72, %v71
    %v87 = vpack.c.b16 %v74, %v73
    %v88 = vpack.c.b16 %v76, %v75
    %v89 = vpack.c.b16 %v78, %v77
    %v90 = vpack.c.b16 %v80, %v79
    %v91 = vpack.c.b16 %v82, %v81
    %v92 = vpack.c.b16 %v84, %v83
    %101 = vmatpush.bf16.msra.mxu0 %v92
    %102 = vmatpush.bf16.msra.mxu0 %v91
    %103 = vmatpush.bf16.msra.mxu0 %v90
    %104 = vmatpush.bf16.msra.mxu0 %v89
    %105 = vmatpush.bf16.msra.mxu0 %v88
    %106 = vmatpush.bf16.msra.mxu0 %v87
    %107 = vmatpush.bf16.msra.mxu0 %v86
    %108 = vmatpush.bf16.msra.mxu0 %v85
    %109 = vmatmul.bf16.gmra.mxu0 %v51
    %v110 = vpop.f32.mrf.mxu0
    %v111 = vadd.f32 0.0, %v110
    %v112 = vpop.f32.mrf.mxu0
    %v113 = vadd.f32 0.0, %v112
    %114 = vdwg.mxu0
    %115 = vst [vmem:[#allocation3] sm:$0xff] %v111
    %116 = vst [vmem:[#allocation3 + $0x8] sm:$0xff] %v113
  $region29: #{hypersage_forward.7} parent=0 // pred_fallthru
    _
  %v117 = vld [vmem:[#allocation2] sm:$0xff]
  %v118 = vld [vmem:[#allocation2 + $0x8] sm:$0xff]
  %v119 = vld [vmem:[%s0] sm:$0xf]
  %v120 = vld [vmem:[%s0 + $0x4] sm:$0xf]
  %v121 = vld [vmem:[%s1] sm:$0xf]
  %v122 = vld [vmem:[%s1 + $0x4] sm:$0xf]
  %v123 = vld [vmem:[%s1 + $0x8] sm:$0xf]
  %v124 = vld [vmem:[%s1 + $0xc] sm:$0xf]
  %v125 = vld [vmem:[%s1 + $0x10] sm:$0xf]
  %v126 = vld [vmem:[%s1 + $0x14] sm:$0xf]
  %v127 = vld [vmem:[%s1 + $0x18] sm:$0xf]
  %v128 = vld [vmem:[%s1 + $0x1c] sm:$0xf]
  %v129 = vld [vmem:[%s1 + $0x20] sm:$0xf]
  %v130 = vld [vmem:[%s1 + $0x24] sm:$0xf]
  %v131 = vld [vmem:[%s1 + $0x28] sm:$0xf]
  %v132 = vld [vmem:[%s1 + $0x2c] sm:$0xf]
  %v133 = vld [vmem:[%s1 + $0x30] sm:$0xf]
  %v134 = vld [vmem:[%s1 + $0x34] sm:$0xf]
  %v135 = vld [vmem:[%s1 + $0x38] sm:$0xf]
  %v136 = vld [vmem:[%s1 + $0x3c] sm:$0xf]
  %v139 = vunpack.c.l.b16 %v119
  %v140 = vunpack.c.l.b16 %v120
  %v141 = vpack.c.b16 %v140, %v139
  %v159 = vunpack.c.l.b16 %v121
  %v160 = vunpack.c.l.b16 %v122
  %v161 = vunpack.c.l.b16 %v123
  %v162 = vunpack.c.l.b16 %v124
  %v163 = vunpack.c.l.b16 %v125
  %v164 = vunpack.c.l.b16 %v126
  %v165 = vunpack.c.l.b16 %v127
  %v166 = vunpack.c.l.b16 %v128
  %v167 = vunpack.c.l.b16 %v129
  %v168 = vunpack.c.l.b16 %v130
  %v169 = vunpack.c.l.b16 %v131
  %v170 = vunpack.c.l.b16 %v132
  %v171 = vunpack.c.l.b16 %v133
  %v172 = vunpack.c.l.b16 %v134
  %v173 = vunpack.c.l.b16 %v135
  %v174 = vunpack.c.l.b16 %v136
  %v175 = vpack.c.b16 %v160, %v159
  %v176 = vpack.c.b16 %v162, %v161
  %v177 = vpack.c.b16 %v164, %v163
  %v178 = vpack.c.b16 %v166, %v165
  %v179 = vpack.c.b16 %v168, %v167
  %v180 = vpack.c.b16 %v170, %v169
  %v181 = vpack.c.b16 %v172, %v171
  %v182 = vpack.c.b16 %v174, %v173
  %191 = vmatpush.bf16.msra.mxu0 %v182
  %192 = vmatpush.bf16.msra.mxu0 %v181
  %193 = vmatpush.bf16.msra.mxu0 %v180
  %194 = vmatpush.bf16.msra.mxu0 %v179
  %195 = vmatpush.bf16.msra.mxu0 %v178
  %196 = vmatpush.bf16.msra.mxu0 %v177
  %197 = vmatpush.bf16.msra.mxu0 %v176
  %198 = vmatpush.bf16.msra.mxu0 %v175
  %199 = vmatmul.bf16.gmra.mxu0 %v141
  %v200 = vpop.f32.mrf.mxu0
  %v201 = vadd.f32 0.0, %v200
  %v202 = vpop.f32.mrf.mxu0
  %v203 = vadd.f32 0.0, %v202
  %204 = vdwg.mxu0
  %v205 = vadd.f32 %v117, %v201
  %v206 = vadd.f32 %v118, %v203
  %207 = vst [vmem:[#allocation2] sm:$0xff] %v205
  %208 = vst [vmem:[#allocation2 + $0x8] sm:$0xff] %v206
  // Predicated region
  $region30: #{hypersage_forward.7} parent=0 // pred_check
    %p209 = pneg %p23
  $region31: #{hypersage_forward.7} parent=0 // pred_check_branch
    %211 = sbr.rel (%p209) target = $region33
  $region32: #{hypersage_forward.7} parent=0 // pred_region
    %v212 = vld [vmem:[#allocation2] sm:$0xff]
    %v213 = vld [vmem:[#allocation2 + $0x8] sm:$0xff]
    %v214 = vpack.c.bf16 %v213, %v212
    %v215 = vld [vmem:[%s5] sm:$0xf]
    %v216 = vld [vmem:[%s5 + $0x4] sm:$0xf]
    %v217 = vld [vmem:[%s5 + $0x8] sm:$0xf]
    %v218 = vld [vmem:[%s5 + $0xc] sm:$0xf]
    %v219 = vld [vmem:[%s5 + $0x10] sm:$0xf]
    %v220 = vld [vmem:[%s5 + $0x14] sm:$0xf]
    %v221 = vld [vmem:[%s5 + $0x18] sm:$0xf]
    %v222 = vld [vmem:[%s5 + $0x1c] sm:$0xf]
    %v223 = vld [vmem:[%s5 + $0x20] sm:$0xf]
    %v224 = vld [vmem:[%s5 + $0x24] sm:$0xf]
    %v225 = vld [vmem:[%s5 + $0x28] sm:$0xf]
    %v226 = vld [vmem:[%s5 + $0x2c] sm:$0xf]
    %v227 = vld [vmem:[%s5 + $0x30] sm:$0xf]
    %v228 = vld [vmem:[%s5 + $0x34] sm:$0xf]
    %v229 = vld [vmem:[%s5 + $0x38] sm:$0xf]
    %v230 = vld [vmem:[%s5 + $0x3c] sm:$0xf]
    %v247 = vunpack.c.l.b16 %v215
    %v248 = vunpack.c.l.b16 %v216
    %v249 = vunpack.c.l.b16 %v217
    %v250 = vunpack.c.l.b16 %v218
    %v251 = vunpack.c.l.b16 %v219
    %v252 = vunpack.c.l.b16 %v220
    %v253 = vunpack.c.l.b16 %v221
    %v254 = vunpack.c.l.b16 %v222
    %v255 = vunpack.c.l.b16 %v223
    %v256 = vunpack.c.l.b16 %v224
    %v257 = vunpack.c.l.b16 %v225
    %v258 = vunpack.c.l.b16 %v226
    %v259 = vunpack.c.l.b16 %v227
    %v260 = vunpack.c.l.b16 %v228
    %v261 = vunpack.c.l.b16 %v229
    %v262 = vunpack.c.l.b16 %v230
    %v263 = vpack.c.b16 %v248, %v247
    %v264 = vpack.c.b16 %v250, %v249
    %v265 = vpack.c.b16 %v252, %v251
    %v266 = vpack.c.b16 %v254, %v253
    %v267 = vpack.c.b16 %v256, %v255
    %v268 = vpack.c.b16 %v258, %v257
    %v269 = vpack.c.b16 %v260, %v259
    %v270 = vpack.c.b16 %v262, %v261
    %279 = vmatpush.bf16.msra.mxu0 %v270
    %280 = vmatpush.bf16.msra.mxu0 %v269
    %281 = vmatpush.bf16.msra.mxu0 %v268
    %282 = vmatpush.bf16.msra.mxu0 %v267
    %283 = vmatpush.bf16.msra.mxu0 %v266
    %284 = vmatpush.bf16.msra.mxu0 %v265
    %285 = vmatpush.bf16.msra.mxu0 %v264
    %286 = vmatpush.bf16.msra.mxu0 %v263
    %287 = vmatmul.bf16.gmra.mxu0 %v214
    %v288 = vpop.f32.mrf.mxu0
    %v289 = vadd.f32 0.0, %v288
    %v290 = vpop.f32.mrf.mxu0
    %v291 = vadd.f32 0.0, %v290
    %292 = vdwg.mxu0
    %v293 = vld [vmem:[#allocation3] sm:$0xff]
    %v294 = vld [vmem:[#allocation3 + $0x8] sm:$0xff]
    %v295 = vld [vmem:[%s3] sm:$0xff]
    %v296 = vld [vmem:[%s3 + $0x8] sm:$0xff]
    %298 = vset.pattern.permute.xlu0 0
    %299 = vperm.xlu0 %298, %v295
    %v300 = vpop.permute.xlu0 %299
    %303 = vset.pattern.permute.xlu0 0
    %304 = vperm.xlu0 %303, %v296
    %v305 = vpop.permute.xlu0 %304
    %v307 = vmul.f32 %v300, %v289
    %v308 = vmul.f32 %v305, %v291
    %v309 = vadd.f32 %v293, %v307
    %v310 = vadd.f32 %v294, %v308
    %vm311 = vcmp.ge.f32.partialorder %v309, 0.0
    %vm312 = vcmp.ge.f32.partialorder %v310, 0.0
    %v313 = vmul.f32 %v309, 0.01
    %v314 = vmul.f32 %v310, 0.01
    %v315 = vsel %vm311, %v309, %v313
    %v316 = vsel %vm312, %v310, %v314
    %317 = vst [vmem:[%s6] sm:$0xff] %v315
    %318 = vst [vmem:[%s6 + $0x8] sm:$0xff] %v316
  $region33: #{hypersage_forward.7} parent=0 // pred_fallthru
    _
  // Predicated region
  $region34: #{hypersage_forward.7} parent=0 // pred_check
    _
  $region35: #{hypersage_forward.7} parent=0 // pred_check_branch
    %320 = sbr.rel (0) target = $region37
  $region36: #{hypersage_forward.7} parent=0 // pred_region
    _
  $region37: #{hypersage_forward.7} parent=0 // pred_fallthru
    _
  // Predicated region
  $region38: #{hypersage_forward.7} parent=0 // pred_check
    _
  $region39: #{hypersage_forward.7} parent=0 // pred_check_branch
    %322 = sbr.rel (0) target = $region41
  $region40: #{hypersage_forward.7} parent=0 // pred_region
    _
  $region41: #{hypersage_forward.7} parent=0 // pred_fallthru
    _

</llo_original>
